<compile_context>
chip_gen: v7x
topology: tpu7x:2x2x1
jax: 0.10.0
libtpu: 0.0.40
codegen_flags: <defaults>
</compile_context>

<pallas_src>
import functools

import jax
import jax.numpy as jnp
from jax import lax
from jax.experimental import pallas as pl
from jax.experimental.pallas import tpu as pltpu


def _spatial_attention_kernel(w_ref, x_ref, o_ref, sum_ref, max_ref, *,
                              W, HW, C, n_red, c_chunk, tail_mask, bf16_max):
    # w_ref:   SMEM (18,)                 Conv2d(2,1,3) weights flattened as [c, ky, kx]
    # x_ref:   VMEM (t_blk, c_chunk, HW)  slab of the native (T, B, C, HW) input
    # o_ref:   VMEM (1, HW)               sigmoid(conv(avg, max)) for this batch element
    # sum_ref: VMEM (1, HW) f32           running sum over T*C
    # max_ref: VMEM (1, HW) f32|bf16      running max over T*C
    t = pl.program_id(1)
    c = pl.program_id(2)
    n_t = pl.num_programs(1)
    n_c = pl.num_programs(2)

    @pl.when((t == 0) & (c == 0))
    def _init():
        sum_ref[...] = jnp.zeros(sum_ref.shape, sum_ref.dtype)
        max_ref[...] = jnp.full(max_ref.shape, -jnp.inf, max_ref.dtype)

    # Single load of the slab feeds both reductions (one vld stream).
    xn = x_ref[...]                           # (t_blk, c_chunk, HW), native dtype
    xf = xn.astype(jnp.float32)
    xm = xn if bf16_max else xf               # max path stays bf16 on bf16 inputs

    def collapse(v, op):                      # (t_blk, c_chunk, HW) -> (1, HW)
        return op(op(v, axis=0), axis=0, keepdims=True)

    def accumulate(xs, xv):
        sum_ref[...] += collapse(xs, jnp.sum)
        max_ref[...] = jnp.maximum(max_ref[...], collapse(xv, jnp.max))

    if tail_mask:   # static: only emitted when C % c_chunk != 0 (C-chunked path)
        is_tail = c == n_c - 1

        @pl.when(jnp.logical_not(is_tail))
        def _full():                          # fast path: no masking work at all
            accumulate(xf, xm)

        @pl.when(is_tail)
        def _tail():                          # mask the garbage rows of the last chunk
            cidx = lax.broadcasted_iota(jnp.int32, xn.shape, 1) + c * c_chunk
            valid = cidx < C
            accumulate(jnp.where(valid, xf, 0.0),
                       jnp.where(valid, xm, jnp.asarray(-jnp.inf, dtype=xm.dtype)))
    else:
        accumulate(xf, xm)

    @pl.when((t == n_t - 1) & (c == n_c - 1))
    def _finalize():
        avg = sum_ref[...] * (1.0 / n_red)                    # (1, HW) f32
        mx = max_ref[...].astype(jnp.float32)                 # (1, HW) f32

        # 3x3 'SAME' conv (zero padding, no bias) on the flattened (1, HW) maps,
        # factored:  out[p] = sum_ky g_ky[p + (ky-1)*W]
        #            g_ky   = sum_{c,kx} w[c,ky,kx] * h_{c,kx}
        #            h_{c,kx}[p] = map_c[p + kx - 1]  (column-boundary masked)
        col = lax.broadcasted_iota(jnp.int32, (1, HW), 1) % W
        mask_l = col >= 1          # reading map[p-1] valid (not in the first column)
        mask_r = col < (W - 1)     # reading map[p+1] valid (not in the last column)

        def shift(m, s):           # result[p] = m[p + s], zero where p+s outside [0, HW)
            if s == 0:
                return m
            if abs(s) >= HW:
                return jnp.zeros_like(m)
            z = jnp.zeros((1, abs(s)), jnp.float32)
            if s > 0:
                return jnp.concatenate([m[:, s:], z], axis=1)
            return jnp.concatenate([z, m[:, :s]], axis=1)

        taps = []
        for m in (avg, mx):
            taps.append((jnp.where(mask_l, shift(m, -1), 0.0),   # kx=0: map[y, x-1]
                         m,                                      # kx=1: map[y, x]
                         jnp.where(mask_r, shift(m, 1), 0.0)))   # kx=2: map[y, x+1]

        g = []
        for ky in range(3):
            acc = jnp.zeros((1, HW), jnp.float32)
            for ci in range(2):
                for kx in range(3):
                    acc = acc + w_ref[ci * 9 + ky * 3 + kx] * taps[ci][kx]
            g.append(acc)

        conv = g[1] + shift(g[0], -W) + shift(g[2], W)        # row (ky) shifts
        o_ref[...] = (1.0 / (1.0 + jnp.exp(-conv))).astype(o_ref.dtype)


def spatial_attention(x, conv_w, *, target_block_bytes=4 << 20):
    """x: (T, B, C, H, W) float (f32/bf16); conv_w: (1, 2, 3, 3) OIHW, no bias.
    Returns (1, B, 1, H, W) float32 — identical layout to the PyTorch module."""
    T, B, C, H, W = x.shape
    HW = H * W
    n_red = T * C

    # Only free glue: merge the trailing spatial dims (lane-dense).  No transpose,
    # no flatten of (T, C) across B, no padding copies of the input.
    x4 = x.reshape(T, B, C, HW)
    w_flat = conv_w.reshape(-1).astype(jnp.float32)            # (18,) [c, ky, kx]

    itemsize = x.dtype.itemsize
    sub = 8 * max(1, 4 // itemsize)            # sublane-tile rows: 8 (f32), 16 (bf16)
    rows_budget = max(1, target_block_bytes // (HW * itemsize))

    if rows_budget >= C:
        # A full (C, HW) slab fits the block budget: pull several T steps per block
        # instead (t_blk divides T exactly, so no masking is ever needed).
        c_chunk, n_c, tail_mask = C, 1, False
        t_budget = max(1, rows_budget // C)
        t_blk = 1
        for d in range(1, T + 1):
            if T % d == 0 and d <= t_budget:
                t_blk = d
        n_t = T // t_blk
    else:
        # Chunk C in sublane-aligned pieces; a ragged tail is masked in-kernel
        # (last chunk only) instead of materializing a padded copy of x.
        t_blk, n_t = 1, T
        c_chunk = max(sub, (rows_budget // sub) * sub)
        if c_chunk >= C:
            c_chunk, n_c, tail_mask = C, 1, False
        else:
            n_c = pl.cdiv(C, c_chunk)
            tail_mask = (C % c_chunk) != 0

    bf16_max = x.dtype == jnp.bfloat16
    max_dtype = jnp.bfloat16 if bf16_max else jnp.float32

    kernel = functools.partial(
        _spatial_attention_kernel, W=W, HW=HW, C=C, n_red=n_red,
        c_chunk=c_chunk, tail_mask=tail_mask, bf16_max=bf16_max)

    out = pl.pallas_call(
        kernel,
        out_shape=jax.ShapeDtypeStruct((B, 1, HW), jnp.float32),
        grid=(B, n_t, n_c),
        in_specs=[
            pl.BlockSpec(memory_space=pltpu.MemorySpace.SMEM),          # conv weights
            pl.BlockSpec((t_blk, None, c_chunk, HW),                    # native-layout slab
                         lambda b, t, c: (t, b, c, 0)),
        ],
        out_specs=pl.BlockSpec((None, 1, HW), lambda b, t, c: (b, 0, 0)),
        scratch_shapes=[pltpu.VMEM((1, HW), jnp.float32),               # running sum
                        pltpu.VMEM((1, HW), max_dtype)],                # running max
        compiler_params=pltpu.CompilerParams(
            # Note: for v7x with B == 1, a further step would be a size-2
            # core-parallel leading axis splitting the T reduction in half.
            dimension_semantics=("parallel", "arbitrary", "arbitrary"),
            vmem_limit_bytes=32 * 1024 * 1024),
    )(w_flat, x4)

    return out.reshape(B, 1, H, W)[None]                        # (1, B, 1, H, W)


def ref_forward(x, conv_w):
    """Pure-JAX reference mirroring the PyTorch module."""
    T, B, C, H, W = x.shape
    xb = jnp.transpose(x, (1, 0, 2, 3, 4)).reshape(B, T * C, H, W).astype(jnp.float32)
    avg = jnp.mean(xb, axis=1, keepdims=True)
    mx = jnp.max(xb, axis=1, keepdims=True)
    cat = jnp.concatenate([avg, mx], axis=1)                    # (B, 2, H, W)
    y = lax.conv_general_dilated(cat, conv_w.astype(jnp.float32), (1, 1), "SAME",
                                 dimension_numbers=("NCHW", "OIHW", "NCHW"))
    y = jnp.transpose(y[:, None], (1, 0, 2, 3, 4))              # (1, B, 1, H, W)
    return jax.nn.sigmoid(y)


if __name__ == "__main__":
    key = jax.random.PRNGKey(0)
    kx_, kw_, kx2_, kx3_ = jax.random.split(key, 4)

    # Deterministic Conv2d(2,1,3,bias=False) weight (PyTorch-style uniform bound).
    fan_in = 2 * 3 * 3
    bound = 1.0 / (fan_in ** 0.5)
    conv_w = jax.random.uniform(kw_, (1, 2, 3, 3), jnp.float32, -bound, bound)

    # Case 1: module-consistent small shapes (full (T, C, HW) slab per batch step).
    T, B, C, H, W = 4, 2, 4, 16, 16
    x = jax.random.normal(kx_, (T, B, C, H, W), dtype=jnp.float32)
    out = jax.block_until_ready(spatial_attention(x, conv_w))
    ref = ref_forward(x, conv_w)
    assert out.shape == (1, B, 1, H, W), out.shape
    assert jnp.allclose(out, ref, atol=1e-5, rtol=1e-5), float(jnp.max(jnp.abs(out - ref)))

    # Case 2: force C-chunk streaming with a ragged, in-kernel-masked tail chunk
    # (C=20, c_chunk=8 -> chunks of 8, 8, 4 valid rows; no jnp.pad of the input).
    T2, B2, C2, H2, W2 = 3, 2, 20, 8, 16
    x2 = jax.random.normal(kx2_, (T2, B2, C2, H2, W2), dtype=jnp.float32)
    out2 = jax.block_until_ready(spatial_attention(x2, conv_w, target_block_bytes=4096))
    ref2 = ref_forward(x2, conv_w)
    assert out2.shape == (1, B2, 1, H2, W2), out2.shape
    assert jnp.allclose(out2, ref2, atol=1e-5, rtol=1e-5), float(jnp.max(jnp.abs(out2 - ref2)))

    # Case 3: bf16 input (max accumulator kept in native bf16).
    x3 = jax.random.normal(kx3_, (T, B, C, H, W), dtype=jnp.float32).astype(jnp.bfloat16)
    out3 = jax.block_until_ready(spatial_attention(x3, conv_w))
    ref3 = ref_forward(x3, conv_w)
    assert out3.shape == (1, B, 1, H, W), out3.shape
    assert jnp.allclose(out3, ref3, atol=1e-4, rtol=1e-4), float(jnp.max(jnp.abs(out3 - ref3)))

    print("KERNEL_OK")
</pallas_src>

<mosaic_0001>
module attributes {stable_mosaic.version = 11 : i64} {
  func.func @_spatial_attention_kernel(%arg0: i32, %arg1: i32, %arg2: i32, %arg3: memref<18xf32, #tpu.memory_space<smem>>, %arg4: memref<4x1x4x256xf32, #tpu.memory_space<vmem>>, %arg5: memref<1x1x256xf32, #tpu.memory_space<vmem>>, %arg6: memref<1x256xf32, #tpu.memory_space<vmem>>, %arg7: memref<1x256xf32, #tpu.memory_space<vmem>>) attributes {dimension_semantics = [#tpu.dimension_semantics<parallel>, #tpu.dimension_semantics<arbitrary>, #tpu.dimension_semantics<arbitrary>], iteration_bounds = array<i64: 2, 1, 1>, scalar_prefetch = 0 : i64, scratch_operands = 2 : i64, tpu.core_type = #tpu.core_type<tc>, window_params = [{transform_indices = @transform_0, window_bounds = array<i64: 18>}, {transform_indices = @transform_1, window_bounds = array<i64: 4, 1, 4, 256>}, {transform_indices = @transform_2, window_bounds = array<i64: 1, 1, 256>}]} {
    %c0_i32 = arith.constant 0 : i32
    %0 = arith.cmpi eq, %arg1, %c0_i32 : i32
    %c0_i32_0 = arith.constant 0 : i32
    %1 = arith.cmpi eq, %arg2, %c0_i32_0 : i32
    %2 = arith.andi %0, %1 : i1
    %3 = arith.extui %2 : i1 to i32
    %c0_i32_1 = arith.constant 0 : i32
    %4 = arith.cmpi ne, %3, %c0_i32_1 : i32
    scf.if %4 {
      %cst_19 = arith.constant 0.000000e+00 : f32
      %24 = vector.broadcast %cst_19 : f32 to vector<1x256xf32>
      %c0_20 = arith.constant 0 : index
      %c0_21 = arith.constant 0 : index
      %25 = vector.load %arg6[%c0_20, %c0_21] : memref<1x256xf32, #tpu.memory_space<vmem>>, vector<1x256xf32>
      tpu.vector_store %arg6[%c0_20, %c0_21], %24 {strides = array<i32>} : memref<1x256xf32, #tpu.memory_space<vmem>>, vector<1x256xf32>,
      %cst_22 = arith.constant 0xFF800000 : f32
      %26 = vector.broadcast %cst_22 : f32 to vector<1x256xf32>
      %c0_23 = arith.constant 0 : index
      %c0_24 = arith.constant 0 : index
      %27 = vector.load %arg7[%c0_23, %c0_24] : memref<1x256xf32, #tpu.memory_space<vmem>>, vector<1x256xf32>
      tpu.vector_store %arg7[%c0_23, %c0_24], %26 {strides = array<i32>} : memref<1x256xf32, #tpu.memory_space<vmem>>, vector<1x256xf32>,
    } else {
    }
    %c0 = arith.constant 0 : index
    %c0_2 = arith.constant 0 : index
    %c0_3 = arith.constant 0 : index
    %c0_4 = arith.constant 0 : index
    %5 = vector.load %arg4[%c0, %c0_2, %c0_3, %c0_4] : memref<4x1x4x256xf32, #tpu.memory_space<vmem>>, vector<4x1x4x256xf32>
    %6 = vector.shape_cast %5 : vector<4x1x4x256xf32> to vector<4x4x256xf32>
    %c0_5 = arith.constant 0 : index
    %c0_6 = arith.constant 0 : index
    %7 = vector.load %arg6[%c0_5, %c0_6] : memref<1x256xf32, #tpu.memory_space<vmem>>, vector<1x256xf32>
    %cst = arith.constant dense<0.000000e+00> : vector<4x256xf32>
    %8 = vector.multi_reduction <add>, %6, %cst [0] : vector<4x4x256xf32> to vector<4x256xf32>
    %cst_7 = arith.constant dense<0.000000e+00> : vector<256xf32>
    %9 = vector.multi_reduction <add>, %8, %cst_7 [0] : vector<4x256xf32> to vector<256xf32>
    %10 = vector.shape_cast %9 : vector<256xf32> to vector<1x256xf32>
    %11 = arith.addf %7, %10 : vector<1x256xf32>
    %c0_8 = arith.constant 0 : index
    %c0_9 = arith.constant 0 : index
    %12 = vector.load %arg6[%c0_8, %c0_9] : memref<1x256xf32, #tpu.memory_space<vmem>>, vector<1x256xf32>
    tpu.vector_store %arg6[%c0_8, %c0_9], %11 {strides = array<i32>} : memref<1x256xf32, #tpu.memory_space<vmem>>, vector<1x256xf32>,
    %c0_10 = arith.constant 0 : index
    %c0_11 = arith.constant 0 : index
    %13 = vector.load %arg7[%c0_10, %c0_11] : memref<1x256xf32, #tpu.memory_space<vmem>>, vector<1x256xf32>
    %cst_12 = arith.constant dense<0xFF800000> : vector<4x256xf32>
    %14 = vector.multi_reduction <maximumf>, %6, %cst_12 [0] : vector<4x4x256xf32> to vector<4x256xf32>
    %cst_13 = arith.constant dense<0xFF800000> : vector<256xf32>
    %15 = vector.multi_reduction <maximumf>, %14, %cst_13 [0] : vector<4x256xf32> to vector<256xf32>
    %16 = vector.shape_cast %15 : vector<256xf32> to vector<1x256xf32>
    %17 = arith.maximumf %13, %16 : vector<1x256xf32>
    %c0_14 = arith.constant 0 : index
    %c0_15 = arith.constant 0 : index
    %18 = vector.load %arg7[%c0_14, %c0_15] : memref<1x256xf32, #tpu.memory_space<vmem>>, vector<1x256xf32>
    tpu.vector_store %arg7[%c0_14, %c0_15], %17 {strides = array<i32>} : memref<1x256xf32, #tpu.memory_space<vmem>>, vector<1x256xf32>,
    %c0_i32_16 = arith.constant 0 : i32
    %19 = arith.cmpi eq, %arg1, %c0_i32_16 : i32
    %c0_i32_17 = arith.constant 0 : i32
    %20 = arith.cmpi eq, %arg2, %c0_i32_17 : i32
    %21 = arith.andi %19, %20 : i1
    %22 = arith.extui %21 : i1 to i32
    %c0_i32_18 = arith.constant 0 : i32
    %23 = arith.cmpi ne, %22, %c0_i32_18 : i32
    scf.if %23 {
      %c0_19 = arith.constant 0 : index
      %c0_20 = arith.constant 0 : index
      %24 = vector.load %arg6[%c0_19, %c0_20] : memref<1x256xf32, #tpu.memory_space<vmem>>, vector<1x256xf32>
      %cst_21 = arith.constant 6.250000e-02 : f32
      %25 = vector.broadcast %cst_21 : f32 to vector<1x256xf32>
      %26 = arith.mulf %24, %25 : vector<1x256xf32>
      %c0_22 = arith.constant 0 : index
      %c0_23 = arith.constant 0 : index
      %27 = vector.load %arg7[%c0_22, %c0_23] : memref<1x256xf32, #tpu.memory_space<vmem>>, vector<1x256xf32>
      %28 = tpu.iota {dimensions = array<i32: 1>} : vector<1x256xi32>
      %c16_i32 = arith.constant 16 : i32
      %c0_i32_24 = arith.constant 0 : i32
      %29 = arith.cmpi eq, %c16_i32, %c0_i32_24 : i32
      %c1_i32 = arith.constant 1 : i32
      %30 = arith.select %29, %c1_i32, %c16_i32 : i32
      %31 = vector.broadcast %30 : i32 to vector<1x256xi32>
      %32 = arith.remsi %28, %31 : vector<1x256xi32>
      %c0_i32_25 = arith.constant 0 : i32
      %33 = vector.broadcast %c0_i32_25 : i32 to vector<1x256xi32>
      %34 = arith.cmpi ne, %32, %33 : vector<1x256xi32>
      %c0_i32_26 = arith.constant 0 : i32
      %35 = vector.broadcast %c0_i32_26 : i32 to vector<1x256xi32>
      %36 = arith.cmpi slt, %32, %35 : vector<1x256xi32>
      %c0_i32_27 = arith.constant 0 : i32
      %37 = arith.cmpi slt, %30, %c0_i32_27 : i32
      %38 = vector.broadcast %37 : i1 to vector<1x256xi1>
      %39 = vector.broadcast %38 : vector<1x256xi1> to vector<1x256xi1>
      %40 = arith.xori %36, %39 : vector<1x256xi1>
      %41 = arith.andi %40, %34 : vector<1x256xi1>
      %42 = vector.broadcast %30 : i32 to vector<1x256xi32>
      %43 = arith.addi %32, %42 : vector<1x256xi32>
      %44 = arith.select %41, %43, %32 : vector<1x256xi1>, vector<1x256xi32>
      %c1_i32_28 = arith.constant 1 : i32
      %45 = vector.broadcast %c1_i32_28 : i32 to vector<1x256xi32>
      %46 = arith.cmpi sge, %44, %45 : vector<1x256xi32>
      %c15_i32 = arith.constant 15 : i32
      %47 = vector.broadcast %c15_i32 : i32 to vector<1x256xi32>
      %48 = arith.cmpi slt, %44, %47 : vector<1x256xi32>
      %cst_29 = arith.constant 0.000000e+00 : f32
      %49 = vector.broadcast %cst_29 : f32 to vector<1x1xf32>
      %50 = vector.extract_strided_slice %26 {offsets = [0, 0], sizes = [1, 255], strides = [1, 1]} : vector<1x256xf32> to vector<1x255xf32>
      %51 = tpu.concatenate %49, %50 in 1 : vector<1x1xf32>, vector<1x255xf32> -> vector<1x256xf32>
      %cst_30 = arith.constant 0.000000e+00 : f32
      %52 = vector.broadcast %cst_30 : f32 to vector<1x256xf32>
      %53 = arith.select %46, %51, %52 : vector<1x256xi1>, vector<1x256xf32>
      %cst_31 = arith.constant 0.000000e+00 : f32
      %54 = vector.broadcast %cst_31 : f32 to vector<1x1xf32>
      %55 = vector.extract_strided_slice %26 {offsets = [0, 1], sizes = [1, 255], strides = [1, 1]} : vector<1x256xf32> to vector<1x255xf32>
      %56 = tpu.concatenate %55, %54 in 1 : vector<1x255xf32>, vector<1x1xf32> -> vector<1x256xf32>
      %cst_32 = arith.constant 0.000000e+00 : f32
      %57 = vector.broadcast %cst_32 : f32 to vector<1x256xf32>
      %58 = arith.select %48, %56, %57 : vector<1x256xi1>, vector<1x256xf32>
      %cst_33 = arith.constant 0.000000e+00 : f32
      %59 = vector.broadcast %cst_33 : f32 to vector<1x1xf32>
      %60 = vector.extract_strided_slice %27 {offsets = [0, 0], sizes = [1, 255], strides = [1, 1]} : vector<1x256xf32> to vector<1x255xf32>
      %61 = tpu.concatenate %59, %60 in 1 : vector<1x1xf32>, vector<1x255xf32> -> vector<1x256xf32>
      %cst_34 = arith.constant 0.000000e+00 : f32
      %62 = vector.broadcast %cst_34 : f32 to vector<1x256xf32>
      %63 = arith.select %46, %61, %62 : vector<1x256xi1>, vector<1x256xf32>
      %cst_35 = arith.constant 0.000000e+00 : f32
      %64 = vector.broadcast %cst_35 : f32 to vector<1x1xf32>
      %65 = vector.extract_strided_slice %27 {offsets = [0, 1], sizes = [1, 255], strides = [1, 1]} : vector<1x256xf32> to vector<1x255xf32>
      %66 = tpu.concatenate %65, %64 in 1 : vector<1x255xf32>, vector<1x1xf32> -> vector<1x256xf32>
      %cst_36 = arith.constant 0.000000e+00 : f32
      %67 = vector.broadcast %cst_36 : f32 to vector<1x256xf32>
      %68 = arith.select %48, %66, %67 : vector<1x256xi1>, vector<1x256xf32>
      %cst_37 = arith.constant 0.000000e+00 : f32
      %69 = vector.broadcast %cst_37 : f32 to vector<1x256xf32>
      %c0_38 = arith.constant 0 : index
      %70 = memref.load %arg3[%c0_38] : memref<18xf32, #tpu.memory_space<smem>>
      %71 = vector.broadcast %70 : f32 to vector<1x256xf32>
      %72 = arith.mulf %71, %53 : vector<1x256xf32>
      %73 = arith.addf %69, %72 : vector<1x256xf32>
      %c1 = arith.constant 1 : index
      %74 = memref.load %arg3[%c1] : memref<18xf32, #tpu.memory_space<smem>>
      %75 = vector.broadcast %74 : f32 to vector<1x256xf32>
      %76 = arith.mulf %75, %26 : vector<1x256xf32>
      %77 = arith.addf %73, %76 : vector<1x256xf32>
      %c2 = arith.constant 2 : index
      %78 = memref.load %arg3[%c2] : memref<18xf32, #tpu.memory_space<smem>>
      %79 = vector.broadcast %78 : f32 to vector<1x256xf32>
      %80 = arith.mulf %79, %58 : vector<1x256xf32>
      %81 = arith.addf %77, %80 : vector<1x256xf32>
      %c9 = arith.constant 9 : index
      %82 = memref.load %arg3[%c9] : memref<18xf32, #tpu.memory_space<smem>>
      %83 = vector.broadcast %82 : f32 to vector<1x256xf32>
      %84 = arith.mulf %83, %63 : vector<1x256xf32>
      %85 = arith.addf %81, %84 : vector<1x256xf32>
      %c10 = arith.constant 10 : index
      %86 = memref.load %arg3[%c10] : memref<18xf32, #tpu.memory_space<smem>>
      %87 = vector.broadcast %86 : f32 to vector<1x256xf32>
      %88 = arith.mulf %87, %27 : vector<1x256xf32>
      %89 = arith.addf %85, %88 : vector<1x256xf32>
      %c11 = arith.constant 11 : index
      %90 = memref.load %arg3[%c11] : memref<18xf32, #tpu.memory_space<smem>>
      %91 = vector.broadcast %90 : f32 to vector<1x256xf32>
      %92 = arith.mulf %91, %68 : vector<1x256xf32>
      %93 = arith.addf %89, %92 : vector<1x256xf32>
      %cst_39 = arith.constant 0.000000e+00 : f32
      %94 = vector.broadcast %cst_39 : f32 to vector<1x256xf32>
      %c3 = arith.constant 3 : index
      %95 = memref.load %arg3[%c3] : memref<18xf32, #tpu.memory_space<smem>>
      %96 = vector.broadcast %95 : f32 to vector<1x256xf32>
      %97 = arith.mulf %96, %53 : vector<1x256xf32>
      %98 = arith.addf %94, %97 : vector<1x256xf32>
      %c4 = arith.constant 4 : index
      %99 = memref.load %arg3[%c4] : memref<18xf32, #tpu.memory_space<smem>>
      %100 = vector.broadcast %99 : f32 to vector<1x256xf32>
      %101 = arith.mulf %100, %26 : vector<1x256xf32>
      %102 = arith.addf %98, %101 : vector<1x256xf32>
      %c5 = arith.constant 5 : index
      %103 = memref.load %arg3[%c5] : memref<18xf32, #tpu.memory_space<smem>>
      %104 = vector.broadcast %103 : f32 to vector<1x256xf32>
      %105 = arith.mulf %104, %58 : vector<1x256xf32>
      %106 = arith.addf %102, %105 : vector<1x256xf32>
      %c12 = arith.constant 12 : index
      %107 = memref.load %arg3[%c12] : memref<18xf32, #tpu.memory_space<smem>>
      %108 = vector.broadcast %107 : f32 to vector<1x256xf32>
      %109 = arith.mulf %108, %63 : vector<1x256xf32>
      %110 = arith.addf %106, %109 : vector<1x256xf32>
      %c13 = arith.constant 13 : index
      %111 = memref.load %arg3[%c13] : memref<18xf32, #tpu.memory_space<smem>>
      %112 = vector.broadcast %111 : f32 to vector<1x256xf32>
      %113 = arith.mulf %112, %27 : vector<1x256xf32>
      %114 = arith.addf %110, %113 : vector<1x256xf32>
      %c14 = arith.constant 14 : index
      %115 = memref.load %arg3[%c14] : memref<18xf32, #tpu.memory_space<smem>>
      %116 = vector.broadcast %115 : f32 to vector<1x256xf32>
      %117 = arith.mulf %116, %68 : vector<1x256xf32>
      %118 = arith.addf %114, %117 : vector<1x256xf32>
      %cst_40 = arith.constant 0.000000e+00 : f32
      %119 = vector.broadcast %cst_40 : f32 to vector<1x256xf32>
      %c6 = arith.constant 6 : index
      %120 = memref.load %arg3[%c6] : memref<18xf32, #tpu.memory_space<smem>>
      %121 = vector.broadcast %120 : f32 to vector<1x256xf32>
      %122 = arith.mulf %121, %53 : vector<1x256xf32>
      %123 = arith.addf %119, %122 : vector<1x256xf32>
      %c7 = arith.constant 7 : index
      %124 = memref.load %arg3[%c7] : memref<18xf32, #tpu.memory_space<smem>>
      %125 = vector.broadcast %124 : f32 to vector<1x256xf32>
      %126 = arith.mulf %125, %26 : vector<1x256xf32>
      %127 = arith.addf %123, %126 : vector<1x256xf32>
      %c8 = arith.constant 8 : index
      %128 = memref.load %arg3[%c8] : memref<18xf32, #tpu.memory_space<smem>>
      %129 = vector.broadcast %128 : f32 to vector<1x256xf32>
      %130 = arith.mulf %129, %58 : vector<1x256xf32>
      %131 = arith.addf %127, %130 : vector<1x256xf32>
      %c15 = arith.constant 15 : index
      %132 = memref.load %arg3[%c15] : memref<18xf32, #tpu.memory_space<smem>>
      %133 = vector.broadcast %132 : f32 to vector<1x256xf32>
      %134 = arith.mulf %133, %63 : vector<1x256xf32>
      %135 = arith.addf %131, %134 : vector<1x256xf32>
      %c16 = arith.constant 16 : index
      %136 = memref.load %arg3[%c16] : memref<18xf32, #tpu.memory_space<smem>>
      %137 = vector.broadcast %136 : f32 to vector<1x256xf32>
      %138 = arith.mulf %137, %27 : vector<1x256xf32>
      %139 = arith.addf %135, %138 : vector<1x256xf32>
      %c17 = arith.constant 17 : index
      %140 = memref.load %arg3[%c17] : memref<18xf32, #tpu.memory_space<smem>>
      %141 = vector.broadcast %140 : f32 to vector<1x256xf32>
      %142 = arith.mulf %141, %68 : vector<1x256xf32>
      %143 = arith.addf %139, %142 : vector<1x256xf32>
      %cst_41 = arith.constant 0.000000e+00 : f32
      %144 = vector.broadcast %cst_41 : f32 to vector<1x16xf32>
      %145 = vector.extract_strided_slice %93 {offsets = [0, 0], sizes = [1, 240], strides = [1, 1]} : vector<1x256xf32> to vector<1x240xf32>
      %146 = tpu.concatenate %144, %145 in 1 : vector<1x16xf32>, vector<1x240xf32> -> vector<1x256xf32>
      %147 = arith.addf %118, %146 : vector<1x256xf32>
      %cst_42 = arith.constant 0.000000e+00 : f32
      %148 = vector.broadcast %cst_42 : f32 to vector<1x16xf32>
      %149 = vector.extract_strided_slice %143 {offsets = [0, 16], sizes = [1, 240], strides = [1, 1]} : vector<1x256xf32> to vector<1x240xf32>
      %150 = tpu.concatenate %149, %148 in 1 : vector<1x240xf32>, vector<1x16xf32> -> vector<1x256xf32>
      %151 = arith.addf %147, %150 : vector<1x256xf32>
      %cst_43 = arith.constant 0.000000e+00 : f32
      %152 = vector.broadcast %cst_43 : f32 to vector<1x256xf32>
      %153 = arith.subf %152, %151 : vector<1x256xf32>
      %154 = math.exp %153 : vector<1x256xf32>
      %cst_44 = arith.constant 1.000000e+00 : f32
      %155 = vector.broadcast %cst_44 : f32 to vector<1x256xf32>
      %156 = arith.addf %155, %154 : vector<1x256xf32>
      %cst_45 = arith.constant 1.000000e+00 : f32
      %157 = vector.broadcast %cst_45 : f32 to vector<1x256xf32>
      %158 = arith.divf %157, %156 : vector<1x256xf32>
      %c0_46 = arith.constant 0 : index
      %c0_47 = arith.constant 0 : index
      %c0_48 = arith.constant 0 : index
      %159 = vector.load %arg5[%c0_46, %c0_47, %c0_48] : memref<1x1x256xf32, #tpu.memory_space<vmem>>, vector<1x1x256xf32>
      %160 = vector.shape_cast %159 : vector<1x1x256xf32> to vector<1x256xf32>
      %161 = vector.shape_cast %158 : vector<1x256xf32> to vector<1x1x256xf32>
      tpu.vector_store %arg5[%c0_46, %c0_47, %c0_48], %161 {strides = array<i32>} : memref<1x1x256xf32, #tpu.memory_space<vmem>>, vector<1x1x256xf32>,
    } else {
    }
    return
  }
  func.func @transform_0(%arg0: i32, %arg1: i32, %arg2: i32) -> i32 {
    %c0_i32 = arith.constant 0 : i32
    %c0_i32_0 = arith.constant 0 : i32
    return %c0_i32 : i32
  }
  func.func @transform_1(%arg0: i32, %arg1: i32, %arg2: i32) -> (i32, i32, i32, i32) {
    %c0_i32 = arith.constant 0 : i32
    %c0_i32_0 = arith.constant 0 : i32
    return %arg1, %arg0, %arg2, %c0_i32 : i32, i32, i32, i32
  }
  func.func @transform_2(%arg0: i32, %arg1: i32, %arg2: i32) -> (i32, i32, i32) {
    %c0_i32 = arith.constant 0 : i32
    %c0_i32_0 = arith.constant 0 : i32
    %c0_i32_1 = arith.constant 0 : i32
    return %arg0, %c0_i32, %c0_i32_0 : i32, i32, i32
  }
}

</mosaic_0001>

<llo_original>
// kernel: tpu_custom_call.1
$region0: #{tpu_custom_call.1}
  #allocation0 [shape = 'u32[]', space=smem, size = 0x4, offset = 0x4, fixed_abs, tag = 'smem constant byte address 0x4 - core index']
  #allocation1 [shape = 'u32[144,128]{1,0:T(1,128)}', space=vmem, size = 0x12000, scoped, tag = 'internal scratch']
  #allocation2 [shape = 'f32[1,256]{1,0:T(1,128)}', space=vmem, size = 0x400, scoped, tag = 'scratch operand']
  #allocation3 [shape = 'f32[1,256]{1,0:T(1,128)}', space=vmem, size = 0x400, scoped, tag = 'scratch operand']
  %s0 = inlined_call_operand.hbm [shape: f32[18], index: 0, kind: input, shape index: {}]
  %s1 = inlined_call_operand.hbm [shape: f32[4,2,4,256], index: 1, kind: input, shape index: {}]
  %s2 = inlined_call_operand.hbm [shape: f32[2,1,256], index: 2, kind: output, shape index: {}]
  %s3 = sld [smem:[#allocation0]]
  $region57: #{tpu_custom_call.1} parent=0
    _
  %s5 = ssub.s32 1, %s3
  %s6 = scalar_select 0, %s5, %s3
  $region1: #{tpu_custom_call.1} parent=0
    #allocation4 [shape = 'u8[512]{0}', space=smem, size = 0x200, scoped, tag = 'input window, operand 0, single buffered']
    #allocation5 [shape = 's32[2]{0}', space=sflag, size = 0x8, scoped, tag = 'scoped memory for tpu_custom_call.1']
    #allocation6 [shape = 's32[2]{0}', space=sflag, size = 0x8, scoped, tag = 'scoped memory for tpu_custom_call.1']
    #allocation7 [shape = 's32[2]{0}', space=sflag, size = 0x8, scoped, tag = 'scoped memory for tpu_custom_call.1']
    #allocation8 [shape = 'u8[32768]{0}', space=vmem, size = 0x8000, scoped, tag = 'input window, operand 1']
    #allocation9 [shape = 'u8[2048]{0}', space=vmem, size = 0x800, scoped, tag = 'output window, operand 0']
    %7 = vsyncpa [#allocation7], 0
    %8 = vsyncpa [#allocation5], 0
    %s9 = scalar_lea.sflag [#allocation5], 1
    %10 = vsyncpa %s9, 0
    %11 = vsyncpa [#allocation6], 0
    %s12 = scalar_lea.sflag [#allocation6], 1
    %13 = vsyncpa %s12, 0
    loop: start=0, step=1, limit=4
    $region2: #{tpu_custom_call.1} parent=1 // loop_pre_header
      _
    $region3: #{tpu_custom_call.1} parent=1 // loop_header
      %s15 = sphi 0, %s19
      %p16 = scmp.ge.s32.totalorder %s15, 4
      %s22 = sphi 0, %s41
      %s23 = sphi 0, %s37
      %s24 = sphi 0, %s33
      %s25 = sphi 0, %s22
      %s26 = sphi 0, %s23
      %s27 = sphi 0, %s24
      %s28 = sphi 0, %s25
      %s29 = sphi 0, %s26
      %s30 = sphi 0, %s27
      %s42 = sphi 0, %s42
      %s44 = sphi 0, %s42
      %s45 = sphi 0, %s44
      %s59 = sphi 0, %s45
      %s69 = sphi 0, %s71
      %s72 = sphi 0, %s69
      %s73 = sphi 0, %s72
      %s89 = sphi 0, %s73
      %s95 = sphi 0, %s97
      %s98 = sphi 0, %s95
      %s99 = sphi 0, %s98
      %s115 = sphi 0, %s99
    $region4: #{tpu_custom_call.1} parent=1 // loop_header_branch
      %18 = sbr.rel (%p16) target = $region8
    $region5: #{tpu_custom_call.1} parent=1 // loop_body
      %s20 = ssub.s32 %s15, 1
      %s21 = ssub.s32 %s15, 2
      %s31 = sadd.s32 1, %s24
      %p32 = scmp.ge.s32.totalorder %s31, 1
      %s33 = scalar_select %p32, 0, %s31
      %s34 = sadd.s32 1, %s23
      %s35 = scalar_select %p32, %s34, %s23
      %p36 = scmp.ge.s32.totalorder %s35, 1
      %s37 = scalar_select %p36, 0, %s35
      %s38 = sadd.s32 1, %s22
      %s39 = scalar_select %p36, %s38, %s22
      %p40 = scmp.ge.s32.totalorder %s39, 2
      %s41 = scalar_select %p40, 0, %s39
      %s43 = sadd.s32 %s42, 1
      %p46 = scmp.eq.s32.totalorder %s15, 1
      %p47 = scmp.ne.s32.totalorder %s42, %s44
      %p48 = scmp.eq.s32.totalorder %s15, 0
      %p49 = por %p47, %p48
      %p50 = scmp.ne.s32.totalorder %s42, %s44
      %p51 = scmp.eq.s32.totalorder %s20, 1
      %p52 = por %p50, %p51
      %p53 = scmp.ne.s32.totalorder %s44, %s45
      %p54 = scmp.eq.s32.totalorder %s20, 0
      %p55 = por %p53, %p54
      %p56 = scmp.ne.s32.totalorder %s44, %s45
      %p57 = scmp.eq.s32.totalorder %s21, 1
      %p58 = por %p56, %p57
      %p60 = scmp.ne.s32.totalorder %s45, %s59
      %p61 = scmp.eq.s32.totalorder %s21, 0
      %p62 = por %p60, %p61
      %s63 = ssub.s32 %s23, %s37
      %s64 = ssub.s32 %s22, %s41
      %s65 = sor.u32 %s63, %s64
      %s66 = ssub.s32 %s24, %s33
      %s67 = sor.u32 %s65, %s66
      %p68 = scmp.eq.s32.totalorder %s67, 0
      %s70 = sadd.s32 %s69, 1
      %s71 = scalar_select %p68, %s69, %s70
      %p74 = pneg %p68
      %p75 = scmp.eq.s32.totalorder %s15, 1
      %p76 = por %p74, %p75
      %p77 = scmp.ne.s32.totalorder %s69, %s72
      %p78 = scmp.eq.s32.totalorder %s15, 0
      %p79 = por %p77, %p78
      %p80 = scmp.ne.s32.totalorder %s69, %s72
      %p81 = scmp.eq.s32.totalorder %s20, 1
      %p82 = por %p80, %p81
      %p83 = scmp.ne.s32.totalorder %s72, %s73
      %p84 = scmp.eq.s32.totalorder %s20, 0
      %p85 = por %p83, %p84
      %p86 = scmp.ne.s32.totalorder %s72, %s73
      %p87 = scmp.eq.s32.totalorder %s21, 1
      %p88 = por %p86, %p87
      %p90 = scmp.ne.s32.totalorder %s73, %s89
      %p91 = scmp.eq.s32.totalorder %s21, 0
      %p92 = por %p90, %p91
      %s93 = ssub.s32 %s22, %s41
      %p94 = scmp.eq.s32.totalorder %s93, 0
      %s96 = sadd.s32 %s95, 1
      %s97 = scalar_select %p94, %s95, %s96
      %p100 = pneg %p94
      %p101 = scmp.eq.s32.totalorder %s15, 1
      %p102 = por %p100, %p101
      %p103 = scmp.ne.s32.totalorder %s95, %s98
      %p104 = scmp.eq.s32.totalorder %s15, 0
      %p105 = por %p103, %p104
      %p106 = scmp.ne.s32.totalorder %s95, %s98
      %p107 = scmp.eq.s32.totalorder %s20, 1
      %p108 = por %p106, %p107
      %p109 = scmp.ne.s32.totalorder %s98, %s99
      %p110 = scmp.eq.s32.totalorder %s20, 0
      %p111 = por %p109, %p110
      %p112 = scmp.ne.s32.totalorder %s98, %s99
      %p113 = scmp.eq.s32.totalorder %s21, 1
      %p114 = por %p112, %p113
      %p116 = scmp.ne.s32.totalorder %s99, %s115
      %p117 = scmp.eq.s32.totalorder %s21, 0
      %p118 = por %p116, %p117
      %p119 = scmp.le.s32.totalorder 1, %s15
      %p120 = scmp.lt.s32.totalorder %s15, 3
      %p121 = pnand %p119, %p120
      %p122 = pneg %p121
      // Predicated region
      $region9: #{tpu_custom_call.1} parent=5 // pred_check
        _
      $region10: #{tpu_custom_call.1} parent=5 // pred_check_branch
        %124 = sbr.rel (%p121) target = $region12
      $region11: #{tpu_custom_call.1} parent=5 // pred_region
        %s125 = ssub.s32 %s15, 1
        // Predicated region
        $region13: #{tpu_custom_call.1} parent=11 // pred_check
          %p126 = pneg %p55
        $region14: #{tpu_custom_call.1} parent=11 // pred_check_branch
          %128 = sbr.rel (%p126) target = $region16
        $region15: #{tpu_custom_call.1} parent=11 // pred_region
          %s130 = ssub.s32 16, 16
          %131 = vsyncadd [#allocation7], %s130
          %134 = dma.hbm_to_smem %s0, 16, [#allocation4], [#allocation7]
        $region16: #{tpu_custom_call.1} parent=11 // pred_fallthru
          _
      $region12: #{tpu_custom_call.1} parent=5 // pred_fallthru
        _
      %p135 = scmp.lt.s32.totalorder %s15, 2
      // Predicated region
      $region17: #{tpu_custom_call.1} parent=5 // pred_check
        %p136 = pneg %p135
      $region18: #{tpu_custom_call.1} parent=5 // pred_check_branch
        %138 = sbr.rel (%p136) target = $region20
      $region19: #{tpu_custom_call.1} parent=5 // pred_region
        // Predicated region
        $region21: #{tpu_custom_call.1} parent=19 // pred_check
          %p139 = pneg %p79
        $region22: #{tpu_custom_call.1} parent=19 // pred_check_branch
          %141 = sbr.rel (%p139) target = $region24
        $region23: #{tpu_custom_call.1} parent=19 // pred_region
          %s142 = sand.u32 %s69, 1
          %s143 = scalar_lea.sflag [#allocation5], %s142
          %s144 = sand.u32 %s69, 1
          %s145 = smul.addr %s144, 32
          %s146 = scalar_lea.vmem [#allocation8], %s145
          %s147 = smul.u32 4, %s23
          %s149 = ssub.s32 512, 512
          %150 = vsyncadd %s143, %s149
          %s151 = smul.addr %s24, 2
          %s152 = smul.addr %s22, 2
          %s153 = sadd.s32 %s151, %s152
          %s154 = smul.addr %s147, 4
          %s155 = sadd.s32 %s153, %s154
          %s156 = smul.addr %s155, 64
          %s157 = scalar_lea.hbm %s1, %s156
          %s158 = sshll.u32 %s146, 4
          %s159 = int_to_ptr.vmem [resolvable:$true] %s158
          %164 = dma.hbm_to_vmem [thread:$0]  %s157, 512, %s159, %s143, 256, 128, 8
        $region24: #{tpu_custom_call.1} parent=19 // pred_fallthru
          _
      $region20: #{tpu_custom_call.1} parent=5 // pred_fallthru
        _
      %p165 = scmp.le.s32.totalorder 1, %s15
      %p166 = scmp.lt.s32.totalorder %s15, 3
      %p167 = pnand %p165, %p166
      %p168 = pneg %p167
      // Predicated region
      $region25: #{tpu_custom_call.1} parent=5 // pred_check
        _
      $region26: #{tpu_custom_call.1} parent=5 // pred_check_branch
        %170 = sbr.rel (%p167) target = $region28
      $region27: #{tpu_custom_call.1} parent=5 // pred_region
        %s171 = ssub.s32 %s15, 1
        // Predicated region
        $region29: #{tpu_custom_call.1} parent=27 // pred_check
          %p172 = pneg %p55
        $region30: #{tpu_custom_call.1} parent=27 // pred_check_branch
          %174 = sbr.rel (%p172) target = $region32
        $region31: #{tpu_custom_call.1} parent=27 // pred_region
          %175 = dma.done [#allocation7], 16
        $region32: #{tpu_custom_call.1} parent=27 // pred_fallthru
          _
        %s176 = sand.u32 %s72, 1
        %s177 = scalar_lea.sflag [#allocation5], %s176
        %s178 = sand.u32 %s72, 1
        %s179 = smul.addr %s178, 32
        %s180 = scalar_lea.vmem [#allocation8], %s179
        // Predicated region
        $region33: #{tpu_custom_call.1} parent=27 // pred_check
          %p181 = pneg %p85
        $region34: #{tpu_custom_call.1} parent=27 // pred_check_branch
          %183 = sbr.rel (%p181) target = $region36
        $region35: #{tpu_custom_call.1} parent=27 // pred_region
          %184 = dma.done %s177, 512
        $region36: #{tpu_custom_call.1} parent=27 // pred_fallthru
          _
        %185 = sfence
        %p186 = pneg %p55
        %p187 = pneg %p52
        %s188 = sand.u32 %s72, 1
        %s189 = scalar_lea.sflag [#allocation5], %s188
        %s190 = sand.u32 %s72, 1
        %s191 = smul.addr %s190, 32
        %s192 = scalar_lea.vmem [#allocation8], %s191
        %p193 = pneg %p85
        %p194 = pneg %p82
        %p195 = pneg %p111
        %p196 = pneg %p108
        %s197 = sand.u32 %s98, 1
        %s198 = scalar_lea.sflag [#allocation6], %s197
        %s199 = sand.u32 %s98, 1
        %s200 = smul.addr %s199, 2
        %s201 = scalar_lea.vmem [#allocation9], %s200
        %s202 = smul.u32 4, %s26
        %p203 = scmp.eq.s32.totalorder %s26, 0
        %p204 = scmp.eq.s32.totalorder %s27, 0
        %p205 = pnand %p203, %p204
        %p206 = pneg %p205
        // Predicated region
        $region37: #{tpu_custom_call.1} parent=27 // pred_check
          _
        $region38: #{tpu_custom_call.1} parent=27 // pred_check_branch
          %208 = sbr.rel (%p205) target = $region40
        $region39: #{tpu_custom_call.1} parent=27 // pred_region
          %v209 = vlaneseq
          %vm210 = vcmp.ge.s32.totalorder %v209, 0
          %vm211 = vcmp.lt.s32.totalorder %v209, 256
          %vm212 = vmand %vm210, %vm211
          %213 = vst.msk [vmem:[#allocation2] sm:$0x3] %vm212, 0.0
          %214 = vst.msk [vmem:[#allocation3] sm:$0x3] %vm212, -inf
        $region40: #{tpu_custom_call.1} parent=27 // pred_fallthru
          _
        %v215 = vld [vmem:[%s180] sm:$0xff]
        %v216 = vld [vmem:[%s180 + $0x8] sm:$0xff]
        %v217 = vld [vmem:[%s180 + $0x10] sm:$0xff]
        %v218 = vld [vmem:[%s180 + $0x18] sm:$0xff]
        %v219 = vld [vmem:[#allocation2] sm:$0x3]
        %v224 = vcombine.high %v215, %v215
        %v225 = vcombine.high %v216, %v216
        %v226 = vcombine.high %v217, %v217
        %v227 = vcombine.high %v218, %v218
        %vm232 = vcmask 1043456
        %v233 = vsel %vm232, %v215, 0.0
        %v234 = vsel %vm232, %v216, 0.0
        %v235 = vadd.f32 %v233, %v234
        %v236 = vsel %vm232, %v217, 0.0
        %v237 = vadd.f32 %v235, %v236
        %v238 = vsel %vm232, %v218, 0.0
        %v239 = vadd.f32 %v237, %v238
        %v240 = vsel %vm232, %v224, 0.0
        %v241 = vsel %vm232, %v225, 0.0
        %v242 = vadd.f32 %v240, %v241
        %v243 = vsel %vm232, %v226, 0.0
        %v244 = vadd.f32 %v242, %v243
        %v245 = vsel %vm232, %v227, 0.0
        %v246 = vadd.f32 %v244, %v245
        %v247 = vsel %vm232, %v239, 0.0
        %v248 = vrot.slane %v247, 4
        %v249 = vadd.f32 %v247, %v248
        %v250 = vrot.slane %v249, 2
        %v251 = vadd.f32 %v249, %v250
        %v252 = vrot.slane %v251, 1
        %v253 = vadd.f32 %v251, %v252
        %v254 = vsel %vm232, %v246, 0.0
        %v255 = vrot.slane %v254, 4
        %v256 = vadd.f32 %v254, %v255
        %v257 = vrot.slane %v256, 2
        %v258 = vadd.f32 %v256, %v257
        %v259 = vrot.slane %v258, 1
        %v260 = vadd.f32 %v258, %v259
        %v263 = vcombine.low %v253, %v260
        %v265 = vunpack.c.l.s4 1966171168
        %v266 = vunpack.c.0.s8 %v265
        %v267 = vlaneseq
        %v268 = vshrl.u32 %v267, 7
        %v269 = vsub.s32 %v266, %v268
        %v270 = vrot.slane %v263, %v269
        %v272 = vunpack.c.l.s4 1966171168
        %v273 = vunpack.c.0.s8 %v272
        %v274 = vlaneseq
        %v275 = vshrl.u32 %v274, 7
        %v276 = vsub.s32 %v273, %v275
        %v277 = vrot.slane %v270, %v276
        %v279 = vadd.f32 %v219, %v277
        %v280 = vlaneseq
        %vm281 = vcmp.ge.s32.totalorder %v280, 0
        %vm282 = vcmp.lt.s32.totalorder %v280, 256
        %vm283 = vmand %vm281, %vm282
        %284 = vst.msk [vmem:[#allocation2] sm:$0x3] %vm283, %v279
        %v285 = vld [vmem:[#allocation3] sm:$0x3]
        %v286 = vmax.f32 %v215, %v216
        %v287 = vmax.f32 %v217, %v218
        %v288 = vmax.f32 %v286, %v287
        %v290 = vcombine.high %v288, %v288
        %v292 = vsel %vm232, %v288, -inf
        %v293 = vrot.slane %v292, 4
        %v294 = vmax.f32 %v292, %v293
        %v295 = vrot.slane %v294, 2
        %v296 = vmax.f32 %v294, %v295
        %v297 = vrot.slane %v296, 1
        %v298 = vmax.f32 %v296, %v297
        %v299 = vsel %vm232, %v290, -inf
        %v300 = vrot.slane %v299, 4
        %v301 = vmax.f32 %v299, %v300
        %v302 = vrot.slane %v301, 2
        %v303 = vmax.f32 %v301, %v302
        %v304 = vrot.slane %v303, 1
        %v305 = vmax.f32 %v303, %v304
        %v308 = vcombine.low %v298, %v305
        %v310 = vunpack.c.l.s4 1966171168
        %v311 = vunpack.c.0.s8 %v310
        %v312 = vlaneseq
        %v313 = vshrl.u32 %v312, 7
        %v314 = vsub.s32 %v311, %v313
        %v315 = vrot.slane %v308, %v314
        %v317 = vunpack.c.l.s4 1966171168
        %v318 = vunpack.c.0.s8 %v317
        %v319 = vlaneseq
        %v320 = vshrl.u32 %v319, 7
        %v321 = vsub.s32 %v318, %v320
        %v322 = vrot.slane %v315, %v321
        %v324 = vmax.f32 %v285, %v322
        %325 = vst.msk [vmem:[#allocation3] sm:$0x3] %vm283, %v324
        // Predicated region
        $region41: #{tpu_custom_call.1} parent=27 // pred_check
          _
        $region42: #{tpu_custom_call.1} parent=27 // pred_check_branch
          %327 = sbr.rel (%p205) target = $region44
        $region43: #{tpu_custom_call.1} parent=27 // pred_region
          %v328 = vld [vmem:[#allocation2] sm:$0x3]
          %v329 = vmul.f32 %v328, 0.0625
          %v330 = vld [vmem:[#allocation3] sm:$0x3]
          %v331 = vlaneseq
          %v332 = vand.u32 %v331, 127
          %v333 = vadd.s32 %v332, 128
          %vm334 = vcmp.lt.s32.totalorder %v332, 0
          %v335 = vsub.s32 0, %v332
          %v336 = vsel %vm334, %v335, %v332
          %v337 = vshrl.u32 %v336, 4
          %v338 = vand.u32 %v336, 15
          %v339 = vsub.s32 0, %v338
          %v340 = vsel %vm334, %v339, %v338
          %vm341 = vcmp.lt.s32.totalorder %v333, 0
          %v342 = vsub.s32 0, %v333
          %v343 = vsel %vm341, %v342, %v333
          %v344 = vshrl.u32 %v343, 4
          %v345 = vand.u32 %v343, 15
          %v346 = vsub.s32 0, %v345
          %v347 = vsel %vm341, %v346, %v345
          %vm348 = vcmp.ne.s32.totalorder %v340, 0
          %vm349 = vcmp.ne.s32.totalorder %v347, 0
          %vm350 = vcmp.lt.s32.totalorder %v340, 0
          %vm351 = vcmp.lt.s32.totalorder %v347, 0
          %vm352 = vmand %vm350, %vm348
          %vm353 = vmand %vm351, %vm349
          %v354 = vadd.s32 %v340, 16
          %v355 = vadd.s32 %v347, 16
          %v356 = vsel %vm352, %v354, %v340
          %v357 = vsel %vm353, %v355, %v347
          %vm358 = vcmp.ge.s32.totalorder %v356, 1
          %vm359 = vcmp.ge.s32.totalorder %v357, 1
          %vm360 = vcmp.lt.s32.totalorder %v356, 15
          %vm361 = vcmp.lt.s32.totalorder %v357, 15
          %v363 = vlaneseq
          %v364 = vshrl.u32 %v363, 7
          %v365 = vsub.s32 0, %v364
          %v366 = vrot.slane %v329, %v365
          %v367 = vlaneseq
          %v368 = vshrl.u32 %v367, 7
          %v369 = vsub.s32 1, %v368
          %v370 = vrot.slane %v329, %v369
          %371 = vrot.lane.b32.xlu0 %v366, 1
          %v372 = vpop.permute.xlu0 %371
          %373 = vrot.lane.b32.xlu0 %v370, 1
          %v374 = vpop.permute.xlu0 %373
          %vm375 = vcmask 7168
          %v376 = vsel %vm375, %v372, %v374
          %v379 = vsel %vm375, 0.0, %v372
          %v380 = vsel %vm358, %v379, 0.0
          %v381 = vsel %vm359, %v376, 0.0
          %382 = vrot.lane.b32.xlu0 %v366, 127
          %v383 = vpop.permute.xlu0 %382
          %384 = vrot.lane.b32.xlu0 %v370, 127
          %v385 = vpop.permute.xlu0 %384
          %vm386 = vcmask 1039360
          %v387 = vsel %vm386, %v383, %v385
          %v390 = vsel %vm386, %v385, 0.0
          %v391 = vsel %vm360, %v387, 0.0
          %v392 = vsel %vm361, %v390, 0.0
          %v394 = vlaneseq
          %v395 = vshrl.u32 %v394, 7
          %v396 = vsub.s32 0, %v395
          %v397 = vrot.slane %v330, %v396
          %v398 = vlaneseq
          %v399 = vshrl.u32 %v398, 7
          %v400 = vsub.s32 1, %v399
          %v401 = vrot.slane %v330, %v400
          %402 = vrot.lane.b32.xlu0 %v397, 1
          %v403 = vpop.permute.xlu0 %402
          %404 = vrot.lane.b32.xlu0 %v401, 1
          %v405 = vpop.permute.xlu0 %404
          %v406 = vsel %vm375, %v403, %v405
          %v409 = vsel %vm375, 0.0, %v403
          %v410 = vsel %vm358, %v409, 0.0
          %v411 = vsel %vm359, %v406, 0.0
          %412 = vrot.lane.b32.xlu0 %v397, 127
          %v413 = vpop.permute.xlu0 %412
          %414 = vrot.lane.b32.xlu0 %v401, 127
          %v415 = vpop.permute.xlu0 %414
          %v416 = vsel %vm386, %v413, %v415
          %v419 = vsel %vm386, %v415, 0.0
          %v420 = vsel %vm360, %v416, 0.0
          %v421 = vsel %vm361, %v419, 0.0
          %s422 = sld [smem:[#allocation4]]
          %v423 = vstv %s422
          %v424 = vmul.f32 %v423, %v380
          %v425 = vmul.f32 %v423, %v381
          %v426 = vadd.f32 %v424, 0.0
          %v427 = vadd.f32 %v425, 0.0
          %s428 = sld [smem:[#allocation4 + $0x1]]
          %v429 = vstv %s428
          %v430 = vmul.f32 %v429, %v329
          %v432 = vlaneseq
          %v433 = vshrl.u32 %v432, 7
          %v434 = vsub.s32 0, %v433
          %v435 = vrot.slane %v430, %v434
          %v436 = vlaneseq
          %v437 = vshrl.u32 %v436, 7
          %v438 = vsub.s32 1, %v437
          %v439 = vrot.slane %v430, %v438
          %v442 = vadd.f32 %v426, %v435
          %v443 = vadd.f32 %v427, %v439
          %s444 = sld [smem:[#allocation4 + $0x2]]
          %v445 = vstv %s444
          %v446 = vmul.f32 %v445, %v391
          %v447 = vmul.f32 %v445, %v392
          %v448 = vadd.f32 %v442, %v446
          %v449 = vadd.f32 %v443, %v447
          %s450 = sld [smem:[#allocation4 + $0x9]]
          %v451 = vstv %s450
          %v452 = vmul.f32 %v451, %v410
          %v453 = vmul.f32 %v451, %v411
          %v454 = vadd.f32 %v448, %v452
          %v455 = vadd.f32 %v449, %v453
          %s456 = sld [smem:[#allocation4 + $0xa]]
          %v457 = vstv %s456
          %v458 = vmul.f32 %v457, %v330
          %v460 = vlaneseq
          %v461 = vshrl.u32 %v460, 7
          %v462 = vsub.s32 0, %v461
          %v463 = vrot.slane %v458, %v462
          %v464 = vlaneseq
          %v465 = vshrl.u32 %v464, 7
          %v466 = vsub.s32 1, %v465
          %v467 = vrot.slane %v458, %v466
          %v470 = vadd.f32 %v454, %v463
          %v471 = vadd.f32 %v455, %v467
          %s472 = sld [smem:[#allocation4 + $0xb]]
          %v473 = vstv %s472
          %v474 = vmul.f32 %v473, %v420
          %v475 = vmul.f32 %v473, %v421
          %v476 = vadd.f32 %v470, %v474
          %v477 = vadd.f32 %v471, %v475
          %s478 = sld [smem:[#allocation4 + $0x3]]
          %v479 = vstv %s478
          %v480 = vmul.f32 %v479, %v380
          %v481 = vmul.f32 %v479, %v381
          %v482 = vadd.f32 %v480, 0.0
          %v483 = vadd.f32 %v481, 0.0
          %s484 = sld [smem:[#allocation4 + $0x4]]
          %v485 = vstv %s484
          %v486 = vmul.f32 %v485, %v329
          %v488 = vlaneseq
          %v489 = vshrl.u32 %v488, 7
          %v490 = vsub.s32 0, %v489
          %v491 = vrot.slane %v486, %v490
          %v492 = vlaneseq
          %v493 = vshrl.u32 %v492, 7
          %v494 = vsub.s32 1, %v493
          %v495 = vrot.slane %v486, %v494
          %v498 = vadd.f32 %v482, %v491
          %v499 = vadd.f32 %v483, %v495
          %s500 = sld [smem:[#allocation4 + $0x5]]
          %v501 = vstv %s500
          %v502 = vmul.f32 %v501, %v391
          %v503 = vmul.f32 %v501, %v392
          %v504 = vadd.f32 %v498, %v502
          %v505 = vadd.f32 %v499, %v503
          %s506 = sld [smem:[#allocation4 + $0xc]]
          %v507 = vstv %s506
          %v508 = vmul.f32 %v507, %v410
          %v509 = vmul.f32 %v507, %v411
          %v510 = vadd.f32 %v504, %v508
          %v511 = vadd.f32 %v505, %v509
          %s512 = sld [smem:[#allocation4 + $0xd]]
          %v513 = vstv %s512
          %v514 = vmul.f32 %v513, %v330
          %v516 = vlaneseq
          %v517 = vshrl.u32 %v516, 7
          %v518 = vsub.s32 0, %v517
          %v519 = vrot.slane %v514, %v518
          %v520 = vlaneseq
          %v521 = vshrl.u32 %v520, 7
          %v522 = vsub.s32 1, %v521
          %v523 = vrot.slane %v514, %v522
          %v526 = vadd.f32 %v510, %v519
          %v527 = vadd.f32 %v511, %v523
          %s528 = sld [smem:[#allocation4 + $0xe]]
          %v529 = vstv %s528
          %v530 = vmul.f32 %v529, %v420
          %v531 = vmul.f32 %v529, %v421
          %v532 = vadd.f32 %v526, %v530
          %v533 = vadd.f32 %v527, %v531
          %s534 = sld [smem:[#allocation4 + $0x6]]
          %v535 = vstv %s534
          %v536 = vmul.f32 %v535, %v380
          %v537 = vmul.f32 %v535, %v381
          %v538 = vadd.f32 %v536, 0.0
          %v539 = vadd.f32 %v537, 0.0
          %s540 = sld [smem:[#allocation4 + $0x7]]
          %v541 = vstv %s540
          %v542 = vmul.f32 %v541, %v329
          %v544 = vlaneseq
          %v545 = vshrl.u32 %v544, 7
          %v546 = vsub.s32 0, %v545
          %v547 = vrot.slane %v542, %v546
          %v548 = vlaneseq
          %v549 = vshrl.u32 %v548, 7
          %v550 = vsub.s32 1, %v549
          %v551 = vrot.slane %v542, %v550
          %v554 = vadd.f32 %v538, %v547
          %v555 = vadd.f32 %v539, %v551
          %s556 = sld [smem:[#allocation4 + $0x8]]
          %v557 = vstv %s556
          %v558 = vmul.f32 %v557, %v391
          %v559 = vmul.f32 %v557, %v392
          %v560 = vadd.f32 %v554, %v558
          %v561 = vadd.f32 %v555, %v559
          %s562 = sld [smem:[#allocation4 + $0xf]]
          %v563 = vstv %s562
          %v564 = vmul.f32 %v563, %v410
          %v565 = vmul.f32 %v563, %v411
          %v566 = vadd.f32 %v560, %v564
          %v567 = vadd.f32 %v561, %v565
          %s568 = sld [smem:[#allocation4 + $0x10]]
          %v569 = vstv %s568
          %v570 = vmul.f32 %v569, %v330
          %v572 = vlaneseq
          %v573 = vshrl.u32 %v572, 7
          %v574 = vsub.s32 0, %v573
          %v575 = vrot.slane %v570, %v574
          %v576 = vlaneseq
          %v577 = vshrl.u32 %v576, 7
          %v578 = vsub.s32 1, %v577
          %v579 = vrot.slane %v570, %v578
          %v582 = vadd.f32 %v566, %v575
          %v583 = vadd.f32 %v567, %v579
          %s584 = sld [smem:[#allocation4 + $0x11]]
          %v585 = vstv %s584
          %v586 = vmul.f32 %v585, %v420
          %v587 = vmul.f32 %v585, %v421
          %v588 = vadd.f32 %v582, %v586
          %v589 = vadd.f32 %v583, %v587
          %592 = vrot.lane.b32.xlu0 %v476, 16
          %v593 = vpop.permute.xlu0 %592
          %594 = vrot.lane.b32.xlu0 %v477, 16
          %v595 = vpop.permute.xlu0 %594
          %vm596 = vcmask 130048
          %v597 = vsel %vm596, %v593, %v595
          %v600 = vsel %vm596, 0.0, %v593
          %v601 = vadd.f32 %v532, %v600
          %v602 = vadd.f32 %v533, %v597
          %605 = vrot.lane.b32.xlu0 %v588, 112
          %v606 = vpop.permute.xlu0 %605
          %607 = vrot.lane.b32.xlu0 %v589, 112
          %v608 = vpop.permute.xlu0 %607
          %vm609 = vcmask 916480
          %v610 = vsel %vm609, %v606, %v608
          %v613 = vsel %vm609, %v608, 0.0
          %v614 = vadd.f32 %v601, %v610
          %v615 = vadd.f32 %v602, %v613
          %v616 = vsub.f32 0.0, %v614
          %v617 = vsub.f32 0.0, %v615
          %v618 = vmul.f32 %v616, 1.442695
          %v619 = vpow.pop %v618
          %v620 = vmul.f32 %v617, 1.442695
          %v621 = vpow.pop %v620
          %v622 = vadd.f32 %v619, 1.0
          %v623 = vadd.f32 %v621, 1.0
          %v624 = vrcp.pop %v622
          %v625 = vmul.f32 1.0, %v624
          %v626 = vrcp.pop %v623
          %v627 = vmul.f32 1.0, %v626
          %v630 = vcombine.low %v625, %v627
          %v632 = vunpack.c.l.s4 1966171168
          %v633 = vunpack.c.0.s8 %v632
          %v634 = vlaneseq
          %v635 = vshrl.u32 %v634, 7
          %v636 = vsub.s32 %v633, %v635
          %v637 = vrot.slane %v630, %v636
          %v639 = vunpack.c.l.s4 1966171168
          %v640 = vunpack.c.0.s8 %v639
          %v641 = vlaneseq
          %v642 = vshrl.u32 %v641, 7
          %v643 = vsub.s32 %v640, %v642
          %v644 = vrot.slane %v637, %v643
          %646 = vst.msk [vmem:[%s201] sm:$0x3] %vm283, %v644
        $region44: #{tpu_custom_call.1} parent=27 // pred_fallthru
          _
        %s647 = sand.u32 %s98, 1
        %s648 = scalar_lea.sflag [#allocation6], %s647
        %s649 = sand.u32 %s98, 1
        %s650 = smul.addr %s649, 2
        %s651 = scalar_lea.vmem [#allocation9], %s650
        // Predicated region
        $region45: #{tpu_custom_call.1} parent=27 // pred_check
          %p652 = pneg %p108
        $region46: #{tpu_custom_call.1} parent=27 // pred_check_branch
          %654 = sbr.rel (%p652) target = $region48
        $region47: #{tpu_custom_call.1} parent=27 // pred_region
          %s656 = ssub.s32 32, 32
          %657 = vsyncadd %s648, %s656
          %s658 = smul.addr %s25, 2
          %s659 = smul.addr %s658, 16
          %s660 = scalar_lea.hbm %s2, %s659
          %s662 = sshll.u32 %s651, 4
          %s663 = int_to_ptr.vmem [resolvable:$true] %s662
          %665 = dma.vmem_to_hbm [thread:$0]  %s663, 32, %s660, %s648
        $region48: #{tpu_custom_call.1} parent=27 // pred_fallthru
          _
      $region28: #{tpu_custom_call.1} parent=5 // pred_fallthru
        _
      %p666 = scmp.le.s32.totalorder 2, %s15
      // Predicated region
      $region49: #{tpu_custom_call.1} parent=5 // pred_check
        %p667 = pneg %p666
      $region50: #{tpu_custom_call.1} parent=5 // pred_check_branch
        %669 = sbr.rel (%p667) target = $region52
      $region51: #{tpu_custom_call.1} parent=5 // pred_region
        %s670 = ssub.s32 %s15, 2
        // Predicated region
        $region53: #{tpu_custom_call.1} parent=51 // pred_check
          %p671 = pneg %p114
        $region54: #{tpu_custom_call.1} parent=51 // pred_check_branch
          %673 = sbr.rel (%p671) target = $region56
        $region55: #{tpu_custom_call.1} parent=51 // pred_region
          %s674 = sand.u32 %s99, 1
          %s675 = scalar_lea.sflag [#allocation6], %s674
          %s676 = sand.u32 %s99, 1
          %s677 = smul.addr %s676, 2
          %s678 = scalar_lea.vmem [#allocation9], %s677
          %679 = dma.done %s675, 32
        $region56: #{tpu_custom_call.1} parent=51 // pred_fallthru
          _
      $region52: #{tpu_custom_call.1} parent=5 // pred_fallthru
        _
    $region6: #{tpu_custom_call.1} parent=1 // loop_footer
      %s19 = sadd.s32 1, %s15
    $region7: #{tpu_custom_call.1} parent=1 // loop_footer_branch
      %14 = sbr.rel target = $region3
    $region8: #{tpu_custom_call.1} parent=1 // loop_exit
      _
    %680 = vsyncpa [#allocation5], 1
    %s681 = scalar_lea.sflag [#allocation5], 1
    %682 = vsyncpa %s681, 1
    %683 = vsyncpa [#allocation6], 1
    %s684 = scalar_lea.sflag [#allocation6], 1
    %685 = vsyncpa %s684, 1
    %686 = vsyncpa [#allocation7], 1
    %s687 = scalar_lea.sflag [#allocation7], 1
    %688 = vsyncpa %s687, 1

</llo_original>
